<compile_context>
chip_gen: v7x
topology: tpu7x:2x2x1
jax: 0.10.0
libtpu: 0.0.40
codegen_flags: <defaults>
</compile_context>

<pallas_src>
import math
from dataclasses import dataclass, field

import jax
import jax.numpy as jnp
from jax.experimental import pallas as pl
from jax.experimental.pallas import tpu as pltpu


_NCHUNK = 3  # 3 x 8-bit chunks: positions < 2**24 are exactly representable as bf16 pieces


# ----------------------------- config + inv_freq (init-time glue) -----------------------------

@dataclass
class LlamaConfig:
    batch_size: int = 2
    vocab_size: int = 128256
    context_length: int = 131072
    embed_dim: int = 64
    intermediate_dim: int = 256
    num_layers: int = 2
    norm_eps: float = 1e-5
    num_attention_heads: int = 4
    num_key_value_groups: int = 2
    rope_theta: float = 500000.0
    rope_scaling: dict = field(default_factory=lambda: {
        'factor': 32.0,
        'low_freq_factor': 1.0,
        'high_freq_factor': 4.0,
        'original_max_position_embeddings': 8192,
    })


def compute_default_params(config: LlamaConfig) -> jnp.ndarray:
    base = config.rope_theta
    head_dim = config.embed_dim // config.num_attention_heads
    exponent = jnp.arange(0, head_dim, 2, dtype=jnp.int32).astype(jnp.float32) / head_dim
    inv_freq = 1.0 / (base ** exponent)
    return inv_freq.astype(jnp.float32)


def compute_llama_params(config: LlamaConfig) -> jnp.ndarray:
    inv_freq = compute_default_params(config)
    factor = config.rope_scaling['factor']
    low_freq_factor = config.rope_scaling['low_freq_factor']
    high_freq_factor = config.rope_scaling['high_freq_factor']
    old_context_len = config.rope_scaling['original_max_position_embeddings']

    low_freq_wavelen = old_context_len / low_freq_factor
    high_freq_wavelen = old_context_len / high_freq_factor
    wavelen = 2 * math.pi / inv_freq

    inv_freq_llama = jnp.where(wavelen > low_freq_wavelen, inv_freq / factor, inv_freq)
    smooth_factor = (old_context_len / wavelen - low_freq_factor) / (high_freq_factor - low_freq_factor)
    smoothed_inv_freq = (1 - smooth_factor) * (inv_freq_llama / factor) + smooth_factor * inv_freq_llama
    is_medium_freq = (wavelen <= low_freq_wavelen) & (wavelen >= high_freq_wavelen)
    inv_freq_llama = jnp.where(is_medium_freq, smoothed_inv_freq, inv_freq_llama)
    return inv_freq_llama.astype(jnp.float32)


# ----------------------------------- Pallas kernel -----------------------------------

def _rope_kernel(pos_ref, sel_ref, invf_ref, cos_ref, sin_ref):
    # pos_ref : (1, TR, NCHUNK*G) bf16 -- positions split into bf16-exact 8-bit chunks
    # sel_ref : (NCHUNK*G, W)     bf16 -- 0/1 selector: sums the chunks into lane groups
    # invf_ref: (1, W)            f32  -- [inv_freq, inv_freq] lane pattern per group
    # cos_ref : (1, TR, W), sin_ref: (1, TR, W)  (W lane-dense, multiple of 128 on fast path)
    #
    # Idle-MXU lane expansion of the positions.  Every operand is a bf16-exact
    # integer chunk or a 0/1 selector and the accumulate is f32, so pos_exp is the
    # exact integer position as f32 (no precision flag needed, bit-exact).
    pos_exp = jnp.dot(pos_ref[0, :, :], sel_ref[...],
                      preferred_element_type=jnp.float32)            # (TR, W)

    # One exact f32 VPU multiply per element => angles bit-identical to the reference.
    emb = pos_exp * invf_ref[...]

    # sin/cos lower to VPU polynomials (likely the binding slot on v6e/v7x); the
    # duplicate_halves=False wrapper path halves this work and the HBM writes.
    cos_ref[0, :, :] = jnp.cos(emb).astype(cos_ref.dtype)
    sin_ref[0, :, :] = jnp.sin(emb).astype(sin_ref.dtype)


def _pick_row_tile(s_rows: int, batch: int, row_align: int, target: int) -> int:
    """Rows of the packed output per grid step.

    - multiple of `row_align` (sublane tiling) unless it is the full extent,
    - capped at `target` so double-buffered blocks stay a few MiB regardless of S
      (no whole-sequence fallback: that could demand 40+ MiB of scoped VMEM),
    - >= 2 sequence blocks when batch == 1 so both v7x TensorCores get work.
    """
    if s_rows <= row_align:
        return s_rows                       # full extent (allowed by the block-shape rule)
    tr = min(target, s_rows)
    tr -= tr % row_align
    tr = max(tr, row_align)
    if batch == 1 and tr >= s_rows and s_rows >= 2 * row_align:
        half_rows = -(-s_rows // 2)                       # ceil(s_rows / 2)
        tr = -(-half_rows // row_align) * row_align       # round up to row_align
    return tr


def llama_rotary_embedding(x, position_ids, inv_freq, *,
                           duplicate_halves: bool = True,
                           max_block_rows: int = 1024):
    """cos/sin RoPE tables matching LlamaRotaryEmbedding.forward.

    x            : only its dtype is used (as in the PyTorch module).
    position_ids : (B, S) integer position ids.
    inv_freq     : (half,) float32.
    Returns (cos, sin): (B, S, 2*half) in x.dtype, or (B, S, half) if
    duplicate_halves=False (perf option: consumer reads each freq twice).
    """
    B, S = position_ids.shape
    half = inv_freq.shape[0]
    per_pos = 2 * half if duplicate_halves else half      # stored values per position
    out_dtype = jnp.dtype(x.dtype)

    # Lane packing: G consecutive positions per 128-lane output row (dense vst).
    if per_pos < 128 and 128 % per_pos == 0 and S % (128 // per_pos) == 0:
        G = 128 // per_pos
    else:
        G = 1  # correct fallback, but not lane-dense (masked partial stores)
    W = G * per_pos
    s_rows = S // G

    # Row tile / grid (ragged last block instead of whole-sequence fallback).
    row_align = max(16, 32 // out_dtype.itemsize)         # bf16 inputs => >= 16 sublanes
    tr = _pick_row_tile(s_rows, B, row_align, max_block_rows)
    grid = (B, pl.cdiv(s_rows, tr))

    # Wrapper-side constants (tiny): positions split into bf16-exact 8-bit chunks so
    # the in-kernel MXU expansion is exact for any realistic position id (< 2**24).
    p = position_ids.astype(jnp.int32).reshape(B, s_rows, G)
    chunks = [(((p >> (8 * k)) & 0xFF) << (8 * k)).astype(jnp.bfloat16)
              for k in range(_NCHUNK)]
    pos_packed = jnp.concatenate(chunks, axis=-1)                     # (B, s_rows, NCHUNK*G)

    lane = jnp.arange(W, dtype=jnp.int32)
    grp = lane // per_pos                                 # which packed position owns this lane
    fidx = (lane % per_pos) % half                        # duplicated [inv_freq, inv_freq] pattern
    invf_row = inv_freq.astype(jnp.float32)[fidx][None, :]            # (1, W)
    sel_one = (grp[None, :] == jnp.arange(G, dtype=jnp.int32)[:, None]).astype(jnp.bfloat16)
    sel = jnp.tile(sel_one, (_NCHUNK, 1))                             # (NCHUNK*G, W), 0/1

    out_struct = jax.ShapeDtypeStruct((B, s_rows, W), out_dtype)
    cost = pl.CostEstimate(
        flops=int(2 * B * s_rows * W * (_NCHUNK * G) + B * s_rows * W),
        transcendentals=int(2 * B * s_rows * W),
        bytes_accessed=int(2 * B * s_rows * W * out_dtype.itemsize
                           + pos_packed.size * 2 + sel.size * 2 + invf_row.size * 4),
    )
    grid_spec = pl.GridSpec(
        grid=grid,
        in_specs=[
            pl.BlockSpec((1, tr, _NCHUNK * G), lambda b, s: (b, s, 0)),
            pl.BlockSpec((_NCHUNK * G, W), lambda b, s: (0, 0)),
            pl.BlockSpec((1, W), lambda b, s: (0, 0)),
        ],
        out_specs=[
            pl.BlockSpec((1, tr, W), lambda b, s: (b, s, 0)),
            pl.BlockSpec((1, tr, W), lambda b, s: (b, s, 0)),
        ],
    )
    cos_p, sin_p = pl.pallas_call(
        _rope_kernel,
        out_shape=(out_struct, out_struct),
        grid_spec=grid_spec,
        compiler_params=pltpu.CompilerParams(
            dimension_semantics=("parallel", "parallel")),
        cost_estimate=cost,
    )(pos_packed, sel, invf_row)

    # (B, s_rows, G*per_pos) -> (B, S, per_pos): identical row-major layout, free reshape.
    return cos_p.reshape(B, S, per_pos), sin_p.reshape(B, S, per_pos)


# -------------------------------------- main --------------------------------------

if __name__ == "__main__":
    cfg = LlamaConfig()
    head_dim = cfg.embed_dim // cfg.num_attention_heads   # 16
    half = head_dim // 2                                   # 8
    B, S = 2, 128

    inv_freq = compute_llama_params(cfg)                   # (8,)

    key = jax.random.PRNGKey(0)
    kx, kp = jax.random.split(key)
    x = jax.random.normal(kx, (B, S, cfg.embed_dim), dtype=jnp.float32)
    # row 0: realistic prefill ids (small angles, tight check);
    # row 1: ids up to context_length (exercises all three bf16 position chunks).
    position_ids = jnp.stack([
        jnp.arange(S, dtype=jnp.int32),
        jax.random.randint(kp, (S,), 0, cfg.context_length, dtype=jnp.int32),
    ], axis=0)

    cos, sin = llama_rotary_embedding(x, position_ids, inv_freq)
    jax.block_until_ready((cos, sin))

    # plain-JAX reference (same math as the PyTorch forward)
    freqs_ref = position_ids.astype(jnp.float32)[:, :, None] * inv_freq[None, None, :]
    emb_ref = jnp.concatenate([freqs_ref, freqs_ref], axis=-1)
    cos_ref, sin_ref = jnp.cos(emb_ref), jnp.sin(emb_ref)

    def check(got, ref, tight_atol=2e-5, loose_atol=1e-3):
        # tight check on the small-angle batch row; loose check everywhere (f32 cos of
        # ~1e5-rad angles is range-reduction-limited in any implementation).
        assert jnp.allclose(got[0], ref[0], atol=tight_atol, rtol=0.0)
        assert jnp.allclose(got, ref, atol=loose_atol, rtol=0.0)

    assert cos.shape == (B, S, head_dim) and sin.shape == (B, S, head_dim)
    check(cos, cos_ref)
    check(sin, sin_ref)

    # bf16 model dtype (halves HBM writes; decisive on store-bound v5e)
    cos_b, sin_b = llama_rotary_embedding(x.astype(jnp.bfloat16), position_ids, inv_freq)
    jax.block_until_ready((cos_b, sin_b))
    assert cos_b.dtype == jnp.bfloat16 and sin_b.dtype == jnp.bfloat16
    assert jnp.allclose(cos_b.astype(jnp.float32), cos_ref, atol=1e-2, rtol=0.0)
    assert jnp.allclose(sin_b.astype(jnp.float32), sin_ref, atol=1e-2, rtol=0.0)

    # opt-in half table (no duplicated halves): half the transcendentals + HBM writes
    cos_h, sin_h = llama_rotary_embedding(x, position_ids, inv_freq, duplicate_halves=False)
    jax.block_until_ready((cos_h, sin_h))
    assert cos_h.shape == (B, S, half) and sin_h.shape == (B, S, half)
    check(cos_h, jnp.cos(freqs_ref))
    check(sin_h, jnp.sin(freqs_ref))

    print("KERNEL_OK")
</pallas_src>

<mosaic_0001>
module attributes {stable_mosaic.version = 11 : i64} {
  func.func @_rope_kernel(%arg0: i32, %arg1: i32, %arg2: memref<1x16x24xbf16, #tpu.memory_space<vmem>>, %arg3: memref<24x128xbf16, #tpu.memory_space<vmem>>, %arg4: memref<1x128xf32, #tpu.memory_space<vmem>>, %arg5: memref<1x16x128xf32, #tpu.memory_space<vmem>>, %arg6: memref<1x16x128xf32, #tpu.memory_space<vmem>>) attributes {dimension_semantics = [#tpu.dimension_semantics<parallel>, #tpu.dimension_semantics<parallel>], iteration_bounds = array<i64: 2, 1>, scalar_prefetch = 0 : i64, scratch_operands = 0 : i64, tpu.core_type = #tpu.core_type<tc>, window_params = [{transform_indices = @transform_0, window_bounds = array<i64: 1, 16, 24>}, {pipeline_mode = #tpu.pipeline_mode<synchronous>, transform_indices = @transform_1, window_bounds = array<i64: 24, 128>}, {pipeline_mode = #tpu.pipeline_mode<synchronous>, transform_indices = @transform_2, window_bounds = array<i64: 1, 128>}, {transform_indices = @transform_3, window_bounds = array<i64: 1, 16, 128>}, {transform_indices = @transform_4, window_bounds = array<i64: 1, 16, 128>}]} {
    %c0 = arith.constant 0 : index
    %c0_0 = arith.constant 0 : index
    %c0_1 = arith.constant 0 : index
    %0 = vector.load %arg2[%c0, %c0_0, %c0_1] : memref<1x16x24xbf16, #tpu.memory_space<vmem>>, vector<1x16x24xbf16>
    %1 = vector.shape_cast %0 : vector<1x16x24xbf16> to vector<16x24xbf16>
    %c0_2 = arith.constant 0 : index
    %c0_3 = arith.constant 0 : index
    %2 = vector.load %arg3[%c0_2, %c0_3] : memref<24x128xbf16, #tpu.memory_space<vmem>>, vector<24x128xbf16>
    %cst = arith.constant dense<0.000000e+00> : vector<16x128xf32>
    %3 = tpu.matmul %1, %2, %cst {dimension_numbers = #tpu.dot_dimension_numbers<[1], [0], [0], [1], [0, 0, 1, 1], [], []>} : vector<16x24xbf16>, vector<24x128xbf16>, vector<16x128xf32> -> vector<16x128xf32>
    %c0_4 = arith.constant 0 : index
    %c0_5 = arith.constant 0 : index
    %4 = vector.load %arg4[%c0_4, %c0_5] : memref<1x128xf32, #tpu.memory_space<vmem>>, vector<1x128xf32>
    %5 = vector.broadcast %4 : vector<1x128xf32> to vector<16x128xf32>
    %6 = arith.mulf %3, %5 : vector<16x128xf32>
    %7 = math.cos %6 : vector<16x128xf32>
    %c0_6 = arith.constant 0 : index
    %c0_7 = arith.constant 0 : index
    %c0_8 = arith.constant 0 : index
    %8 = vector.load %arg5[%c0_6, %c0_7, %c0_8] : memref<1x16x128xf32, #tpu.memory_space<vmem>>, vector<1x16x128xf32>
    %9 = vector.shape_cast %8 : vector<1x16x128xf32> to vector<16x128xf32>
    %10 = vector.shape_cast %7 : vector<16x128xf32> to vector<1x16x128xf32>
    tpu.vector_store %arg5[%c0_6, %c0_7, %c0_8], %10 {strides = array<i32>} : memref<1x16x128xf32, #tpu.memory_space<vmem>>, vector<1x16x128xf32>,
    %11 = math.sin %6 : vector<16x128xf32>
    %c0_9 = arith.constant 0 : index
    %c0_10 = arith.constant 0 : index
    %c0_11 = arith.constant 0 : index
    %12 = vector.load %arg6[%c0_9, %c0_10, %c0_11] : memref<1x16x128xf32, #tpu.memory_space<vmem>>, vector<1x16x128xf32>
    %13 = vector.shape_cast %12 : vector<1x16x128xf32> to vector<16x128xf32>
    %14 = vector.shape_cast %11 : vector<16x128xf32> to vector<1x16x128xf32>
    tpu.vector_store %arg6[%c0_9, %c0_10, %c0_11], %14 {strides = array<i32>} : memref<1x16x128xf32, #tpu.memory_space<vmem>>, vector<1x16x128xf32>,
    return
  }
  func.func @transform_0(%arg0: i32, %arg1: i32) -> (i32, i32, i32) {
    %c0_i32 = arith.constant 0 : i32
    %c0_i32_0 = arith.constant 0 : i32
    return %arg0, %arg1, %c0_i32 : i32, i32, i32
  }
  func.func @transform_1(%arg0: i32, %arg1: i32) -> (i32, i32) {
    %c0_i32 = arith.constant 0 : i32
    %c0_i32_0 = arith.constant 0 : i32
    %c0_i32_1 = arith.constant 0 : i32
    return %c0_i32, %c0_i32_0 : i32, i32
  }
  func.func @transform_2(%arg0: i32, %arg1: i32) -> (i32, i32) {
    %c0_i32 = arith.constant 0 : i32
    %c0_i32_0 = arith.constant 0 : i32
    %c0_i32_1 = arith.constant 0 : i32
    return %c0_i32, %c0_i32_0 : i32, i32
  }
  func.func @transform_3(%arg0: i32, %arg1: i32) -> (i32, i32, i32) {
    %c0_i32 = arith.constant 0 : i32
    %c0_i32_0 = arith.constant 0 : i32
    return %arg0, %arg1, %c0_i32 : i32, i32, i32
  }
  func.func @transform_4(%arg0: i32, %arg1: i32) -> (i32, i32, i32) {
    %c0_i32 = arith.constant 0 : i32
    %c0_i32_0 = arith.constant 0 : i32
    return %arg0, %arg1, %c0_i32 : i32, i32, i32
  }
}

</mosaic_0001>

<llo_original>
// kernel: tpu_custom_call.1
$region0: #{tpu_custom_call.1}
  #allocation0 [shape = 'u32[]', space=smem, size = 0x4, offset = 0x4, fixed_abs, tag = 'smem constant byte address 0x4 - core index']
  #allocation1 [shape = 'u32[144,128]{1,0:T(1,128)}', space=vmem, size = 0x12000, scoped, tag = 'internal scratch']
  %s0 = inlined_call_operand.hbm [shape: bf16[2,16,24], index: 0, kind: input, shape index: {}]
  %s1 = inlined_call_operand.hbm [shape: bf16[24,128], index: 1, kind: input, shape index: {}]
  %s2 = inlined_call_operand.vmem [shape: f32[1,128], index: 2, kind: input, shape index: {}]
  %s3 = inlined_call_operand.hbm [shape: f32[2,16,128], index: 3, kind: output, shape index: {0}]
  %s4 = inlined_call_operand.hbm [shape: f32[2,16,128], index: 4, kind: output, shape index: {1}]
  %5 = xla_tuple %s3, %s4
  %s6 = sld [smem:[#allocation0]]
  $region61: #{tpu_custom_call.1} parent=0
    _
  %s8 = ssub.s32 1, %s6
  %s9 = scalar_select 0, %s8, %s6
  $region1: #{tpu_custom_call.1} parent=0
    #allocation2 [shape = 'u8[8192]{0}', space=vmem, size = 0x2000, scoped, tag = 'input window, operand 0']
    #allocation3 [shape = 's32[2]{0}', space=sflag, size = 0x8, scoped, tag = 'scoped memory for tpu_custom_call.1']
    #allocation4 [shape = 's32[2]{0}', space=sflag, size = 0x8, scoped, tag = 'scoped memory for tpu_custom_call.1']
    #allocation5 [shape = 'u8[6144]{0}', space=vmem, size = 0x1800, scoped, tag = 'input window, operand 1, single buffered']
    #allocation6 [shape = 's32[1]{0}', space=sflag, size = 0x4, scoped, tag = 'scoped memory for tpu_custom_call.1']
    #allocation7 [shape = 'u8[16384]{0}', space=vmem, size = 0x4000, scoped, tag = 'output window, operand 0']
    #allocation8 [shape = 'u8[16384]{0}', space=vmem, size = 0x4000, scoped, tag = 'output window, operand 1']
    #allocation9 [shape = 's32[2]{0}', space=sflag, size = 0x8, scoped, tag = 'scoped memory for tpu_custom_call.1']
    %10 = vsyncpa [#allocation3], 0
    %s11 = scalar_lea.sflag [#allocation3], 1
    %12 = vsyncpa %s11, 0
    %13 = vsyncpa [#allocation6], 0
    %14 = vsyncpa [#allocation4], 0
    %s15 = scalar_lea.sflag [#allocation4], 1
    %16 = vsyncpa %s15, 0
    %17 = vsyncpa [#allocation9], 0
    %s18 = scalar_lea.sflag [#allocation9], 1
    %19 = vsyncpa %s18, 0
    loop: start=0, step=1, limit=4
    $region2: #{tpu_custom_call.1} parent=1 // loop_pre_header
      _
    $region3: #{tpu_custom_call.1} parent=1 // loop_header
      %s21 = sphi 0, %s25
      %p22 = scmp.ge.s32.totalorder %s21, 4
      %s28 = sphi 0, %s40
      %s29 = sphi 0, %s36
      %s30 = sphi 0, %s28
      %s31 = sphi 0, %s29
      %s32 = sphi 0, %s30
      %s33 = sphi 0, %s31
      %s45 = sphi 0, %s47
      %s48 = sphi 0, %s45
      %s49 = sphi 0, %s48
      %s65 = sphi 0, %s49
      %s69 = sphi 0, %s69
      %s71 = sphi 0, %s69
      %s72 = sphi 0, %s71
      %s86 = sphi 0, %s72
      %s90 = sphi 0, %s90
      %s92 = sphi 0, %s90
      %s93 = sphi 0, %s92
      %s107 = sphi 0, %s93
      %s115 = sphi 0, %s117
      %s118 = sphi 0, %s115
      %s119 = sphi 0, %s118
      %s135 = sphi 0, %s119
      %s143 = sphi 0, %s145
      %s146 = sphi 0, %s143
      %s147 = sphi 0, %s146
      %s163 = sphi 0, %s147
    $region4: #{tpu_custom_call.1} parent=1 // loop_header_branch
      %24 = sbr.rel (%p22) target = $region8
    $region5: #{tpu_custom_call.1} parent=1 // loop_body
      %s26 = ssub.s32 %s21, 1
      %s27 = ssub.s32 %s21, 2
      %s34 = sadd.s32 1, %s29
      %p35 = scmp.ge.s32.totalorder %s34, 1
      %s36 = scalar_select %p35, 0, %s34
      %s37 = sadd.s32 1, %s28
      %s38 = scalar_select %p35, %s37, %s28
      %p39 = scmp.ge.s32.totalorder %s38, 2
      %s40 = scalar_select %p39, 0, %s38
      %s41 = ssub.s32 %s28, %s40
      %s42 = ssub.s32 %s29, %s36
      %s43 = sor.u32 %s41, %s42
      %p44 = scmp.eq.s32.totalorder %s43, 0
      %s46 = sadd.s32 %s45, 1
      %s47 = scalar_select %p44, %s45, %s46
      %p50 = pneg %p44
      %p51 = scmp.eq.s32.totalorder %s21, 1
      %p52 = por %p50, %p51
      %p53 = scmp.ne.s32.totalorder %s45, %s48
      %p54 = scmp.eq.s32.totalorder %s21, 0
      %p55 = por %p53, %p54
      %p56 = scmp.ne.s32.totalorder %s45, %s48
      %p57 = scmp.eq.s32.totalorder %s26, 1
      %p58 = por %p56, %p57
      %p59 = scmp.ne.s32.totalorder %s48, %s49
      %p60 = scmp.eq.s32.totalorder %s26, 0
      %p61 = por %p59, %p60
      %p62 = scmp.ne.s32.totalorder %s48, %s49
      %p63 = scmp.eq.s32.totalorder %s27, 1
      %p64 = por %p62, %p63
      %p66 = scmp.ne.s32.totalorder %s49, %s65
      %p67 = scmp.eq.s32.totalorder %s27, 0
      %p68 = por %p66, %p67
      %s70 = sadd.s32 %s69, 1
      %p73 = scmp.eq.s32.totalorder %s21, 1
      %p74 = scmp.ne.s32.totalorder %s69, %s71
      %p75 = scmp.eq.s32.totalorder %s21, 0
      %p76 = por %p74, %p75
      %p77 = scmp.ne.s32.totalorder %s69, %s71
      %p78 = scmp.eq.s32.totalorder %s26, 1
      %p79 = por %p77, %p78
      %p80 = scmp.ne.s32.totalorder %s71, %s72
      %p81 = scmp.eq.s32.totalorder %s26, 0
      %p82 = por %p80, %p81
      %p83 = scmp.ne.s32.totalorder %s71, %s72
      %p84 = scmp.eq.s32.totalorder %s27, 1
      %p85 = por %p83, %p84
      %p87 = scmp.ne.s32.totalorder %s72, %s86
      %p88 = scmp.eq.s32.totalorder %s27, 0
      %p89 = por %p87, %p88
      %s91 = sadd.s32 %s90, 1
      %p94 = scmp.eq.s32.totalorder %s21, 1
      %p95 = scmp.ne.s32.totalorder %s90, %s92
      %p96 = scmp.eq.s32.totalorder %s21, 0
      %p97 = por %p95, %p96
      %p98 = scmp.ne.s32.totalorder %s90, %s92
      %p99 = scmp.eq.s32.totalorder %s26, 1
      %p100 = por %p98, %p99
      %p101 = scmp.ne.s32.totalorder %s92, %s93
      %p102 = scmp.eq.s32.totalorder %s26, 0
      %p103 = por %p101, %p102
      %p104 = scmp.ne.s32.totalorder %s92, %s93
      %p105 = scmp.eq.s32.totalorder %s27, 1
      %p106 = por %p104, %p105
      %p108 = scmp.ne.s32.totalorder %s93, %s107
      %p109 = scmp.eq.s32.totalorder %s27, 0
      %p110 = por %p108, %p109
      %s111 = ssub.s32 %s28, %s40
      %s112 = ssub.s32 %s29, %s36
      %s113 = sor.u32 %s111, %s112
      %p114 = scmp.eq.s32.totalorder %s113, 0
      %s116 = sadd.s32 %s115, 1
      %s117 = scalar_select %p114, %s115, %s116
      %p120 = pneg %p114
      %p121 = scmp.eq.s32.totalorder %s21, 1
      %p122 = por %p120, %p121
      %p123 = scmp.ne.s32.totalorder %s115, %s118
      %p124 = scmp.eq.s32.totalorder %s21, 0
      %p125 = por %p123, %p124
      %p126 = scmp.ne.s32.totalorder %s115, %s118
      %p127 = scmp.eq.s32.totalorder %s26, 1
      %p128 = por %p126, %p127
      %p129 = scmp.ne.s32.totalorder %s118, %s119
      %p130 = scmp.eq.s32.totalorder %s26, 0
      %p131 = por %p129, %p130
      %p132 = scmp.ne.s32.totalorder %s118, %s119
      %p133 = scmp.eq.s32.totalorder %s27, 1
      %p134 = por %p132, %p133
      %p136 = scmp.ne.s32.totalorder %s119, %s135
      %p137 = scmp.eq.s32.totalorder %s27, 0
      %p138 = por %p136, %p137
      %s139 = ssub.s32 %s28, %s40
      %s140 = ssub.s32 %s29, %s36
      %s141 = sor.u32 %s139, %s140
      %p142 = scmp.eq.s32.totalorder %s141, 0
      %s144 = sadd.s32 %s143, 1
      %s145 = scalar_select %p142, %s143, %s144
      %p148 = pneg %p142
      %p149 = scmp.eq.s32.totalorder %s21, 1
      %p150 = por %p148, %p149
      %p151 = scmp.ne.s32.totalorder %s143, %s146
      %p152 = scmp.eq.s32.totalorder %s21, 0
      %p153 = por %p151, %p152
      %p154 = scmp.ne.s32.totalorder %s143, %s146
      %p155 = scmp.eq.s32.totalorder %s26, 1
      %p156 = por %p154, %p155
      %p157 = scmp.ne.s32.totalorder %s146, %s147
      %p158 = scmp.eq.s32.totalorder %s26, 0
      %p159 = por %p157, %p158
      %p160 = scmp.ne.s32.totalorder %s146, %s147
      %p161 = scmp.eq.s32.totalorder %s27, 1
      %p162 = por %p160, %p161
      %p164 = scmp.ne.s32.totalorder %s147, %s163
      %p165 = scmp.eq.s32.totalorder %s27, 0
      %p166 = por %p164, %p165
      %p167 = scmp.le.s32.totalorder 1, %s21
      %p168 = scmp.lt.s32.totalorder %s21, 3
      %p169 = pnand %p167, %p168
      %p170 = pneg %p169
      // Predicated region
      $region9: #{tpu_custom_call.1} parent=5 // pred_check
        _
      $region10: #{tpu_custom_call.1} parent=5 // pred_check_branch
        %172 = sbr.rel (%p169) target = $region12
      $region11: #{tpu_custom_call.1} parent=5 // pred_region
        %s173 = ssub.s32 %s21, 1
        // Predicated region
        $region13: #{tpu_custom_call.1} parent=11 // pred_check
          %p174 = pneg %p82
        $region14: #{tpu_custom_call.1} parent=11 // pred_check_branch
          %176 = sbr.rel (%p174) target = $region16
        $region15: #{tpu_custom_call.1} parent=11 // pred_region
          %s178 = ssub.s32 192, 192
          %179 = vsyncadd [#allocation6], %s178
          %s180 = sshll.u32 [#allocation5], 4
          %s181 = int_to_ptr.vmem [resolvable:$true] %s180
          %186 = dma.hbm_to_vmem [thread:$0]  %s1, 192, %s181, [#allocation6], 64, 64, 4
        $region16: #{tpu_custom_call.1} parent=11 // pred_fallthru
          _
        // Predicated region
        $region17: #{tpu_custom_call.1} parent=11 // pred_check
          %p187 = pneg %p103
        $region18: #{tpu_custom_call.1} parent=11 // pred_check_branch
          %189 = sbr.rel (%p187) target = $region20
        $region19: #{tpu_custom_call.1} parent=11 // pred_region
          _
        $region20: #{tpu_custom_call.1} parent=11 // pred_fallthru
          _
      $region12: #{tpu_custom_call.1} parent=5 // pred_fallthru
        _
      %p190 = scmp.lt.s32.totalorder %s21, 2
      // Predicated region
      $region21: #{tpu_custom_call.1} parent=5 // pred_check
        %p191 = pneg %p190
      $region22: #{tpu_custom_call.1} parent=5 // pred_check_branch
        %193 = sbr.rel (%p191) target = $region24
      $region23: #{tpu_custom_call.1} parent=5 // pred_region
        // Predicated region
        $region25: #{tpu_custom_call.1} parent=23 // pred_check
          %p194 = pneg %p55
        $region26: #{tpu_custom_call.1} parent=23 // pred_check_branch
          %196 = sbr.rel (%p194) target = $region28
        $region27: #{tpu_custom_call.1} parent=23 // pred_region
          %s197 = sand.u32 %s45, 1
          %s198 = scalar_lea.sflag [#allocation3], %s197
          %s199 = sand.u32 %s45, 1
          %s200 = smul.addr %s199, 8
          %s201 = scalar_lea.vmem [#allocation2], %s200
          %s202 = smul.u32 2, %s29
          %s204 = ssub.s32 128, 128
          %205 = vsyncadd %s198, %s204
          %s206 = smul.addr %s28, 2
          %s207 = sadd.s32 %s202, %s206
          %s208 = smul.addr %s207, 64
          %s209 = scalar_lea.hbm %s0, %s208
          %s210 = sshll.u32 %s201, 4
          %s211 = int_to_ptr.vmem [resolvable:$true] %s210
          %216 = dma.hbm_to_vmem [thread:$0]  %s209, 128, %s211, %s198, 64, 64, 4
        $region28: #{tpu_custom_call.1} parent=23 // pred_fallthru
          _
      $region24: #{tpu_custom_call.1} parent=5 // pred_fallthru
        _
      %p217 = scmp.le.s32.totalorder 1, %s21
      %p218 = scmp.lt.s32.totalorder %s21, 3
      %p219 = pnand %p217, %p218
      %p220 = pneg %p219
      // Predicated region
      $region29: #{tpu_custom_call.1} parent=5 // pred_check
        _
      $region30: #{tpu_custom_call.1} parent=5 // pred_check_branch
        %222 = sbr.rel (%p219) target = $region32
      $region31: #{tpu_custom_call.1} parent=5 // pred_region
        %s223 = ssub.s32 %s21, 1
        %s224 = sand.u32 %s48, 1
        %s225 = scalar_lea.sflag [#allocation3], %s224
        %s226 = sand.u32 %s48, 1
        %s227 = smul.addr %s226, 8
        %s228 = scalar_lea.vmem [#allocation2], %s227
        // Predicated region
        $region33: #{tpu_custom_call.1} parent=31 // pred_check
          %p229 = pneg %p61
        $region34: #{tpu_custom_call.1} parent=31 // pred_check_branch
          %231 = sbr.rel (%p229) target = $region36
        $region35: #{tpu_custom_call.1} parent=31 // pred_region
          %232 = dma.done %s225, 128
        $region36: #{tpu_custom_call.1} parent=31 // pred_fallthru
          _
        // Predicated region
        $region37: #{tpu_custom_call.1} parent=31 // pred_check
          %p233 = pneg %p82
        $region38: #{tpu_custom_call.1} parent=31 // pred_check_branch
          %235 = sbr.rel (%p233) target = $region40
        $region39: #{tpu_custom_call.1} parent=31 // pred_region
          %236 = dma.done [#allocation6], 192
        $region40: #{tpu_custom_call.1} parent=31 // pred_fallthru
          _
        %s237 = sand.u32 %s48, 1
        %s238 = scalar_lea.sflag [#allocation3], %s237
        %s239 = sand.u32 %s48, 1
        %s240 = smul.addr %s239, 8
        %s241 = scalar_lea.vmem [#allocation2], %s240
        %p242 = pneg %p61
        %p243 = pneg %p58
        %p244 = pneg %p82
        %p245 = pneg %p79
        %p246 = pneg %p103
        %p247 = pneg %p100
        %p248 = pneg %p131
        %p249 = pneg %p128
        %s250 = sand.u32 %s118, 1
        %s251 = scalar_lea.sflag [#allocation4], %s250
        %s252 = sand.u32 %s118, 1
        %s253 = smul.addr %s252, 16
        %s254 = scalar_lea.vmem [#allocation7], %s253
        %p255 = pneg %p159
        %p256 = pneg %p156
        %s257 = sand.u32 %s146, 1
        %s258 = scalar_lea.sflag [#allocation9], %s257
        %s259 = sand.u32 %s146, 1
        %s260 = smul.addr %s259, 16
        %s261 = scalar_lea.vmem [#allocation8], %s260
        %s262 = smul.u32 2, %s31
        %s263 = smul.u32 2, %s31
        %s264 = smul.u32 2, %s31
        %v266 = vld [vmem:[%s228] sm:$0xf]
        %v267 = vld [vmem:[%s228 + $0x4] sm:$0xf]
        %v268 = vld [vmem:[#allocation5] sm:$0xf]
        %v269 = vld [vmem:[#allocation5 + $0x4] sm:$0xf]
        %v270 = vld [vmem:[#allocation5 + $0x8] sm:$0xf]
        %v273 = vunpack.c.l.b16 %v266
        %v274 = vunpack.c.l.b16 %v267
        %v275 = vpack.c.b16 %v274, %v273
        %v279 = vunpack.c.l.b16 %v268
        %v280 = vunpack.c.l.b16 %v269
        %v281 = vunpack.c.l.b16 %v270
        %v282 = vpack.c.b16 %v280, %v279
        %v283 = vpack.c.b16 %v281, %v281
        %vm285 = vcmask 195584
        %v287 = vsel %vm285, %v275, 0
        %vm289 = vcmask 1043456
        %v291 = vsel %vm289, %v283, 0
        %293 = vmatprep.subr.bf16.mxu0 0
        %294 = vmatpush1.bf16.msra.mxu0 %v282
        %295 = vmatprep.subr.bf16.mxu0 0
        %296 = vmatpush1.bf16.msra.mxu0 %v291
        %297 = vmatprep.subr.bf16.mxu0 0
        %298 = vmatpush1.bf16.msra.mxu0 0
        %299 = vmatprep.subr.bf16.mxu0 0
        %300 = vmatpush1.bf16.msra.mxu0 0
        %301 = vmatprep.subr.bf16.mxu0 0
        %302 = vmatpush1.bf16.msra.mxu0 0
        %303 = vmatprep.subr.bf16.mxu0 0
        %304 = vmatpush1.bf16.msra.mxu0 0
        %305 = vmatprep.subr.bf16.mxu0 0
        %306 = vmatpush1.bf16.msra.mxu0 0
        %307 = vmatprep.subr.bf16.mxu0 0
        %308 = vmatpush1.bf16.msra.mxu0 0
        %309 = vmatprep.subr.bf16.mxu0 0
        %310 = vmatpush1.bf16.msra.mxu0 0
        %311 = vmatprep.subr.bf16.mxu0 0
        %312 = vmatpush1.bf16.msra.mxu0 0
        %313 = vmatprep.subr.bf16.mxu0 0
        %314 = vmatpush1.bf16.msra.mxu0 0
        %315 = vmatprep.subr.bf16.mxu0 0
        %316 = vmatpush1.bf16.msra.mxu0 0
        %317 = vmatprep.subr.bf16.mxu0 0
        %318 = vmatpush1.bf16.msra.mxu0 0
        %319 = vmatprep.subr.bf16.mxu0 0
        %320 = vmatpush1.bf16.msra.mxu0 0
        %321 = vmatprep.subr.bf16.mxu0 0
        %322 = vmatpush1.bf16.msra.mxu0 0
        %323 = vmatprep.subr.bf16.mxu0 0
        %324 = vmatpush1.bf16.msra.mxu0 0
        %325 = vmatprep.mubr.bf16.mxu0 0
        %326 = vmatmul.mubr.bf16.gmra.mrb[0].mxu0 %v287
        %v327 = vpop.f32.mrb[0].mxu0
        %v328 = vadd.f32 0.0, %v327
        %v329 = vpop.f32.mrb[0].mxu0
        %v330 = vpop.f32.mrb[0].mxu0
        %v331 = vadd.f32 0.0, %v330
        %v332 = vpop.f32.mrb[0].mxu0
        %333 = vdwg.mxu0
        %v334 = vld [vmem:[%s2] sm:$0x1]
        %v336 = vlaneseq
        %v337 = vshrl.u32 %v336, 7
        %v338 = vsub.s32 0, %v337
        %v339 = vrot.slane %v334, %v338
        %v341 = vmul.f32 %v328, %v339
        %v342 = vmul.f32 %v331, %v339
        %v343 = vand.u32 2147483647, %v341
        %vm344 = vcmp.le.f32.partialorder %v343, 0.7853982
        %vm345 = vcmp.lt.s32.totalorder %v341, 0
        %v346 = vand.u32 %v341, 2139095040
        %v347 = vshrl.u32 %v346, 23
        %v348 = vsub.s32 %v347, 127
        %v349 = vand.u32 2147483647, %v341
        %v350 = vand.u32 %v349, 8388607
        %v351 = vor.u32 %v350, 8388608
        %v352 = vsub.s32 0, %v351
        %v353 = vadd.s32 %v348, 1
        %vm354 = vcmp.gt.s32.totalorder %v353, 0
        %v355 = vsel %vm354, %v353, 0
        %v356 = vshrl.u32 %v355, 5
        %v357 = vand.u32 %v355, 31
        %v358 = vsub.s32 32, %v357
        %v359 = vshrl.u32 683565275, %v358
        %v360 = vshll.u32 683565275, %v357
        %v361 = vshrl.u32 2475754826, %v358
        %v362 = vor.u32 %v360, %v361
        %v363 = vshll.u32 2475754826, %v357
        %v364 = vshrl.u32 2131351028, %v358
        %v365 = vor.u32 %v363, %v364
        %v366 = vshll.u32 2131351028, %v357
        %v367 = vshrl.u32 2102212464, %v358
        %v368 = vor.u32 %v366, %v367
        %v369 = vshll.u32 2102212464, %v357
        %v370 = vshrl.u32 920167782, %v358
        %v371 = vor.u32 %v369, %v370
        %v372 = vshll.u32 920167782, %v357
        %v373 = vshrl.u32 1326507024, %v358
        %v374 = vor.u32 %v372, %v373
        %vm375 = vcmp.lt.s32.totalorder %v356, 1
        %vm376 = vcmp.lt.s32.totalorder %v356, 2
        %vm377 = vcmp.lt.s32.totalorder %v356, 3
        %vm378 = vcmp.lt.s32.totalorder %v356, 4
        %v379 = vsel %vm375, %v359, %v362
        %v380 = vsel %vm378, %v368, 2102212464
        %v381 = vsel %vm377, %v365, %v380
        %v382 = vsel %vm376, %v379, %v381
        %v383 = vsel %vm375, %v362, %v365
        %v384 = vsel %vm378, %v371, 920167782
        %v385 = vsel %vm377, %v368, %v384
        %v386 = vsel %vm376, %v383, %v385
        %v387 = vsel %vm375, %v365, %v368
        %v388 = vsel %vm378, %v374, 1326507024
        %v389 = vsel %vm377, %v371, %v388
        %v390 = vsel %vm376, %v387, %v389
        %v391 = vshll.u32 %v351, 8
        %v392 = vmul.u32.u64.compose %v391, %v390
        %v393 = vextract.low.u32 %v392
        %v394 = vextract.high.u32 %v392
        %v395 = vmul.u32.u64.compose %v391, %v386
        %v396 = vextract.low.u32 %v395
        %v397 = vextract.high.u32 %v395
        %v398 = vmul.u32 %v391, %v382
        %v399 = vadd.s32 %v394, %v396
        %vm400 = vc.u32 %v394, %v396
        %v401 = vadd.s32 %v397, 1
        %v402 = vsel %vm400, %v401, %v397
        %v403 = vadd.s32 %v398, %v402
        %v404 = vadd.s32 %v403, 536870912
        %v405 = vshrl.u32 %v404, 30
        %v406 = vshll.u32 %v405, 30
        %v407 = vsub.s32 %v403, %v406
        %vm408 = vcmp.lt.s32.totalorder %v407, 0
        %v409 = vsub.s32 0, %v407
        %v410 = vsel %vm408, %v409, %v407
        %v411 = vclz %v410
        %v412 = vsub.s32 %v411, 2
        %vm413 = vcmp.gt.s32.totalorder 0, %v412
        %v414 = vsel %vm413, 0, %v412
        %v415 = vsub.s32 32, %v414
        %v416 = vshll.u32 %v407, %v414
        %v417 = vshrl.u32 %v399, %v415
        %v418 = vor.u32 %v416, %v417
        %v419 = vsub.s32 4294967266, %v414
        %v420 = vadd.s32 %v419, 127
        %v421 = vshll.u32 %v420, 23
        %v422 = vor.u32 4788187, %v421
        %v423 = vand.u32 2147483647, %v422
        %v425 = vcvt.s32.f32 %v418
        %v426 = vmul.f32 %v425, %v423
        %v427 = vxor.u32 %v426, 2147483648
        %v428 = vsel %vm345, %v427, %v426
        %v429 = vsub.s32 4, %v405
        %v430 = vsel %vm345, %v429, %v405
        %v431 = vsel %vm344, %v341, %v428
        %v432 = vsel %vm344, 0, %v430
        %v433 = vcosq.f32.pop %v431
        %v434 = vsinq.f32.pop %v431
        %vm435 = vweird.f32 %v341
        %v436 = vand.u32 %v432, 3
        %vm437 = vcmp.lt.s32.totalorder %v436, 2
        %vm438 = vcmp.eq.s32.totalorder %v436, 0
        %v439 = vxor.u32 %v434, 2147483648
        %v440 = vsel %vm438, %v433, %v439
        %vm441 = vcmp.eq.s32.totalorder %v436, 2
        %v442 = vxor.u32 %v433, 2147483648
        %v443 = vsel %vm441, %v442, %v434
        %v444 = vsel %vm437, %v440, %v443
        %v445 = vsel %vm435, nan, %v444
        %v446 = vand.u32 2147483647, %v342
        %vm447 = vcmp.le.f32.partialorder %v446, 0.7853982
        %vm448 = vcmp.lt.s32.totalorder %v342, 0
        %v449 = vand.u32 %v342, 2139095040
        %v450 = vshrl.u32 %v449, 23
        %v451 = vsub.s32 %v450, 127
        %v452 = vand.u32 2147483647, %v342
        %v453 = vand.u32 %v452, 8388607
        %v454 = vor.u32 %v453, 8388608
        %v455 = vsub.s32 0, %v454
        %v456 = vadd.s32 %v451, 1
        %vm457 = vcmp.gt.s32.totalorder %v456, 0
        %v458 = vsel %vm457, %v456, 0
        %v459 = vshrl.u32 %v458, 5
        %v460 = vand.u32 %v458, 31
        %v461 = vsub.s32 32, %v460
        %v462 = vshrl.u32 683565275, %v461
        %v463 = vshll.u32 683565275, %v460
        %v464 = vshrl.u32 2475754826, %v461
        %v465 = vor.u32 %v463, %v464
        %v466 = vshll.u32 2475754826, %v460
        %v467 = vshrl.u32 2131351028, %v461
        %v468 = vor.u32 %v466, %v467
        %v469 = vshll.u32 2131351028, %v460
        %v470 = vshrl.u32 2102212464, %v461
        %v471 = vor.u32 %v469, %v470
        %v472 = vshll.u32 2102212464, %v460
        %v473 = vshrl.u32 920167782, %v461
        %v474 = vor.u32 %v472, %v473
        %v475 = vshll.u32 920167782, %v460
        %v476 = vshrl.u32 1326507024, %v461
        %v477 = vor.u32 %v475, %v476
        %vm478 = vcmp.lt.s32.totalorder %v459, 1
        %vm479 = vcmp.lt.s32.totalorder %v459, 2
        %vm480 = vcmp.lt.s32.totalorder %v459, 3
        %vm481 = vcmp.lt.s32.totalorder %v459, 4
        %v482 = vsel %vm478, %v462, %v465
        %v483 = vsel %vm481, %v471, 2102212464
        %v484 = vsel %vm480, %v468, %v483
        %v485 = vsel %vm479, %v482, %v484
        %v486 = vsel %vm478, %v465, %v468
        %v487 = vsel %vm481, %v474, 920167782
        %v488 = vsel %vm480, %v471, %v487
        %v489 = vsel %vm479, %v486, %v488
        %v490 = vsel %vm478, %v468, %v471
        %v491 = vsel %vm481, %v477, 1326507024
        %v492 = vsel %vm480, %v474, %v491
        %v493 = vsel %vm479, %v490, %v492
        %v494 = vshll.u32 %v454, 8
        %v495 = vmul.u32.u64.compose %v494, %v493
        %v496 = vextract.low.u32 %v495
        %v497 = vextract.high.u32 %v495
        %v498 = vmul.u32.u64.compose %v494, %v489
        %v499 = vextract.low.u32 %v498
        %v500 = vextract.high.u32 %v498
        %v501 = vmul.u32 %v494, %v485
        %v502 = vadd.s32 %v497, %v499
        %vm503 = vc.u32 %v497, %v499
        %v504 = vadd.s32 %v500, 1
        %v505 = vsel %vm503, %v504, %v500
        %v506 = vadd.s32 %v501, %v505
        %v507 = vadd.s32 %v506, 536870912
        %v508 = vshrl.u32 %v507, 30
        %v509 = vshll.u32 %v508, 30
        %v510 = vsub.s32 %v506, %v509
        %vm511 = vcmp.lt.s32.totalorder %v510, 0
        %v512 = vsub.s32 0, %v510
        %v513 = vsel %vm511, %v512, %v510
        %v514 = vclz %v513
        %v515 = vsub.s32 %v514, 2
        %vm516 = vcmp.gt.s32.totalorder 0, %v515
        %v517 = vsel %vm516, 0, %v515
        %v518 = vsub.s32 32, %v517
        %v519 = vshll.u32 %v510, %v517
        %v520 = vshrl.u32 %v502, %v518
        %v521 = vor.u32 %v519, %v520
        %v522 = vsub.s32 4294967266, %v517
        %v523 = vadd.s32 %v522, 127
        %v524 = vshll.u32 %v523, 23
        %v525 = vor.u32 4788187, %v524
        %v526 = vand.u32 2147483647, %v525
        %v528 = vcvt.s32.f32 %v521
        %v529 = vmul.f32 %v528, %v526
        %v530 = vxor.u32 %v529, 2147483648
        %v531 = vsel %vm448, %v530, %v529
        %v532 = vsub.s32 4, %v508
        %v533 = vsel %vm448, %v532, %v508
        %v534 = vsel %vm447, %v342, %v531
        %v535 = vsel %vm447, 0, %v533
        %v536 = vcosq.f32.pop %v534
        %v537 = vsinq.f32.pop %v534
        %vm538 = vweird.f32 %v342
        %v539 = vand.u32 %v535, 3
        %vm540 = vcmp.lt.s32.totalorder %v539, 2
        %vm541 = vcmp.eq.s32.totalorder %v539, 0
        %v542 = vxor.u32 %v537, 2147483648
        %v543 = vsel %vm541, %v536, %v542
        %vm544 = vcmp.eq.s32.totalorder %v539, 2
        %v545 = vxor.u32 %v536, 2147483648
        %v546 = vsel %vm544, %v545, %v537
        %v547 = vsel %vm540, %v543, %v546
        %v548 = vsel %vm538, nan, %v547
        %549 = vst [vmem:[%s254] sm:$0xff] %v445
        %550 = vst [vmem:[%s254 + $0x8] sm:$0xff] %v548
        %v551 = vand.u32 2147483647, %v341
        %vm552 = vcmp.le.f32.partialorder %v551, 0.7853982
        %vm553 = vcmp.lt.s32.totalorder %v341, 0
        %v554 = vand.u32 %v341, 2139095040
        %v555 = vshrl.u32 %v554, 23
        %v556 = vsub.s32 %v555, 127
        %v557 = vand.u32 2147483647, %v341
        %v558 = vand.u32 %v557, 8388607
        %v559 = vor.u32 %v558, 8388608
        %v560 = vsub.s32 0, %v559
        %v561 = vadd.s32 %v556, 1
        %vm562 = vcmp.gt.s32.totalorder %v561, 0
        %v563 = vsel %vm562, %v561, 0
        %v564 = vshrl.u32 %v563, 5
        %v565 = vand.u32 %v563, 31
        %v566 = vsub.s32 32, %v565
        %v567 = vshrl.u32 683565275, %v566
        %v568 = vshll.u32 683565275, %v565
        %v569 = vshrl.u32 2475754826, %v566
        %v570 = vor.u32 %v568, %v569
        %v571 = vshll.u32 2475754826, %v565
        %v572 = vshrl.u32 2131351028, %v566
        %v573 = vor.u32 %v571, %v572
        %v574 = vshll.u32 2131351028, %v565
        %v575 = vshrl.u32 2102212464, %v566
        %v576 = vor.u32 %v574, %v575
        %v577 = vshll.u32 2102212464, %v565
        %v578 = vshrl.u32 920167782, %v566
        %v579 = vor.u32 %v577, %v578
        %v580 = vshll.u32 920167782, %v565
        %v581 = vshrl.u32 1326507024, %v566
        %v582 = vor.u32 %v580, %v581
        %vm583 = vcmp.lt.s32.totalorder %v564, 1
        %vm584 = vcmp.lt.s32.totalorder %v564, 2
        %vm585 = vcmp.lt.s32.totalorder %v564, 3
        %vm586 = vcmp.lt.s32.totalorder %v564, 4
        %v587 = vsel %vm583, %v567, %v570
        %v588 = vsel %vm586, %v576, 2102212464
        %v589 = vsel %vm585, %v573, %v588
        %v590 = vsel %vm584, %v587, %v589
        %v591 = vsel %vm583, %v570, %v573
        %v592 = vsel %vm586, %v579, 920167782
        %v593 = vsel %vm585, %v576, %v592
        %v594 = vsel %vm584, %v591, %v593
        %v595 = vsel %vm583, %v573, %v576
        %v596 = vsel %vm586, %v582, 1326507024
        %v597 = vsel %vm585, %v579, %v596
        %v598 = vsel %vm584, %v595, %v597
        %v599 = vshll.u32 %v559, 8
        %v600 = vmul.u32.u64.compose %v599, %v598
        %v601 = vextract.low.u32 %v600
        %v602 = vextract.high.u32 %v600
        %v603 = vmul.u32.u64.compose %v599, %v594
        %v604 = vextract.low.u32 %v603
        %v605 = vextract.high.u32 %v603
        %v606 = vmul.u32 %v599, %v590
        %v607 = vadd.s32 %v602, %v604
        %vm608 = vc.u32 %v602, %v604
        %v609 = vadd.s32 %v605, 1
        %v610 = vsel %vm608, %v609, %v605
        %v611 = vadd.s32 %v606, %v610
        %v612 = vadd.s32 %v611, 536870912
        %v613 = vshrl.u32 %v612, 30
        %v614 = vshll.u32 %v613, 30
        %v615 = vsub.s32 %v611, %v614
        %vm616 = vcmp.lt.s32.totalorder %v615, 0
        %v617 = vsub.s32 0, %v615
        %v618 = vsel %vm616, %v617, %v615
        %v619 = vclz %v618
        %v620 = vsub.s32 %v619, 2
        %vm621 = vcmp.gt.s32.totalorder 0, %v620
        %v622 = vsel %vm621, 0, %v620
        %v623 = vsub.s32 32, %v622
        %v624 = vshll.u32 %v615, %v622
        %v625 = vshrl.u32 %v607, %v623
        %v626 = vor.u32 %v624, %v625
        %v627 = vsub.s32 4294967266, %v622
        %v628 = vadd.s32 %v627, 127
        %v629 = vshll.u32 %v628, 23
        %v630 = vor.u32 4788187, %v629
        %v631 = vand.u32 2147483647, %v630
        %v633 = vcvt.s32.f32 %v626
        %v634 = vmul.f32 %v633, %v631
        %v635 = vxor.u32 %v634, 2147483648
        %v636 = vsel %vm553, %v635, %v634
        %v637 = vsub.s32 4, %v613
        %v638 = vsel %vm553, %v637, %v613
        %v639 = vsel %vm552, %v341, %v636
        %v640 = vsel %vm552, 0, %v638
        %v641 = vcosq.f32.pop %v639
        %v642 = vsinq.f32.pop %v639
        %vm643 = vweird.f32 %v341
        %v644 = vadd.s32 %v640, 3
        %v645 = vand.u32 %v644, 3
        %vm646 = vcmp.lt.s32.totalorder %v645, 2
        %vm647 = vcmp.eq.s32.totalorder %v645, 0
        %v648 = vxor.u32 %v642, 2147483648
        %v649 = vsel %vm647, %v641, %v648
        %vm650 = vcmp.eq.s32.totalorder %v645, 2
        %v651 = vxor.u32 %v641, 2147483648
        %v652 = vsel %vm650, %v651, %v642
        %v653 = vsel %vm646, %v649, %v652
        %v654 = vsel %vm643, nan, %v653
        %v655 = vand.u32 2147483647, %v342
        %vm656 = vcmp.le.f32.partialorder %v655, 0.7853982
        %vm657 = vcmp.lt.s32.totalorder %v342, 0
        %v658 = vand.u32 %v342, 2139095040
        %v659 = vshrl.u32 %v658, 23
        %v660 = vsub.s32 %v659, 127
        %v661 = vand.u32 2147483647, %v342
        %v662 = vand.u32 %v661, 8388607
        %v663 = vor.u32 %v662, 8388608
        %v664 = vsub.s32 0, %v663
        %v665 = vadd.s32 %v660, 1
        %vm666 = vcmp.gt.s32.totalorder %v665, 0
        %v667 = vsel %vm666, %v665, 0
        %v668 = vshrl.u32 %v667, 5
        %v669 = vand.u32 %v667, 31
        %v670 = vsub.s32 32, %v669
        %v671 = vshrl.u32 683565275, %v670
        %v672 = vshll.u32 683565275, %v669
        %v673 = vshrl.u32 2475754826, %v670
        %v674 = vor.u32 %v672, %v673
        %v675 = vshll.u32 2475754826, %v669
        %v676 = vshrl.u32 2131351028, %v670
        %v677 = vor.u32 %v675, %v676
        %v678 = vshll.u32 2131351028, %v669
        %v679 = vshrl.u32 2102212464, %v670
        %v680 = vor.u32 %v678, %v679
        %v681 = vshll.u32 2102212464, %v669
        %v682 = vshrl.u32 920167782, %v670
        %v683 = vor.u32 %v681, %v682
        %v684 = vshll.u32 920167782, %v669
        %v685 = vshrl.u32 1326507024, %v670
        %v686 = vor.u32 %v684, %v685
        %vm687 = vcmp.lt.s32.totalorder %v668, 1
        %vm688 = vcmp.lt.s32.totalorder %v668, 2
        %vm689 = vcmp.lt.s32.totalorder %v668, 3
        %vm690 = vcmp.lt.s32.totalorder %v668, 4
        %v691 = vsel %vm687, %v671, %v674
        %v692 = vsel %vm690, %v680, 2102212464
        %v693 = vsel %vm689, %v677, %v692
        %v694 = vsel %vm688, %v691, %v693
        %v695 = vsel %vm687, %v674, %v677
        %v696 = vsel %vm690, %v683, 920167782
        %v697 = vsel %vm689, %v680, %v696
        %v698 = vsel %vm688, %v695, %v697
        %v699 = vsel %vm687, %v677, %v680
        %v700 = vsel %vm690, %v686, 1326507024
        %v701 = vsel %vm689, %v683, %v700
        %v702 = vsel %vm688, %v699, %v701
        %v703 = vshll.u32 %v663, 8
        %v704 = vmul.u32.u64.compose %v703, %v702
        %v705 = vextract.low.u32 %v704
        %v706 = vextract.high.u32 %v704
        %v707 = vmul.u32.u64.compose %v703, %v698
        %v708 = vextract.low.u32 %v707
        %v709 = vextract.high.u32 %v707
        %v710 = vmul.u32 %v703, %v694
        %v711 = vadd.s32 %v706, %v708
        %vm712 = vc.u32 %v706, %v708
        %v713 = vadd.s32 %v709, 1
        %v714 = vsel %vm712, %v713, %v709
        %v715 = vadd.s32 %v710, %v714
        %v716 = vadd.s32 %v715, 536870912
        %v717 = vshrl.u32 %v716, 30
        %v718 = vshll.u32 %v717, 30
        %v719 = vsub.s32 %v715, %v718
        %vm720 = vcmp.lt.s32.totalorder %v719, 0
        %v721 = vsub.s32 0, %v719
        %v722 = vsel %vm720, %v721, %v719
        %v723 = vclz %v722
        %v724 = vsub.s32 %v723, 2
        %vm725 = vcmp.gt.s32.totalorder 0, %v724
        %v726 = vsel %vm725, 0, %v724
        %v727 = vsub.s32 32, %v726
        %v728 = vshll.u32 %v719, %v726
        %v729 = vshrl.u32 %v711, %v727
        %v730 = vor.u32 %v728, %v729
        %v731 = vsub.s32 4294967266, %v726
        %v732 = vadd.s32 %v731, 127
        %v733 = vshll.u32 %v732, 23
        %v734 = vor.u32 4788187, %v733
        %v735 = vand.u32 2147483647, %v734
        %v737 = vcvt.s32.f32 %v730
        %v738 = vmul.f32 %v737, %v735
        %v739 = vxor.u32 %v738, 2147483648
        %v740 = vsel %vm657, %v739, %v738
        %v741 = vsub.s32 4, %v717
        %v742 = vsel %vm657, %v741, %v717
        %v743 = vsel %vm656, %v342, %v740
        %v744 = vsel %vm656, 0, %v742
        %v745 = vcosq.f32.pop %v743
        %v746 = vsinq.f32.pop %v743
        %vm747 = vweird.f32 %v342
        %v748 = vadd.s32 %v744, 3
        %v749 = vand.u32 %v748, 3
        %vm750 = vcmp.lt.s32.totalorder %v749, 2
        %vm751 = vcmp.eq.s32.totalorder %v749, 0
        %v752 = vxor.u32 %v746, 2147483648
        %v753 = vsel %vm751, %v745, %v752
        %vm754 = vcmp.eq.s32.totalorder %v749, 2
        %v755 = vxor.u32 %v745, 2147483648
        %v756 = vsel %vm754, %v755, %v746
        %v757 = vsel %vm750, %v753, %v756
        %v758 = vsel %vm747, nan, %v757
        %759 = vst [vmem:[%s261] sm:$0xff] %v654
        %760 = vst [vmem:[%s261 + $0x8] sm:$0xff] %v758
        %s761 = sand.u32 %s118, 1
        %s762 = scalar_lea.sflag [#allocation4], %s761
        %s763 = sand.u32 %s118, 1
        %s764 = smul.addr %s763, 16
        %s765 = scalar_lea.vmem [#allocation7], %s764
        %s766 = sand.u32 %s146, 1
        %s767 = scalar_lea.sflag [#allocation9], %s766
        %s768 = sand.u32 %s146, 1
        %s769 = smul.addr %s768, 16
        %s770 = scalar_lea.vmem [#allocation8], %s769
        // Predicated region
        $region41: #{tpu_custom_call.1} parent=31 // pred_check
          %p771 = pneg %p128
        $region42: #{tpu_custom_call.1} parent=31 // pred_check_branch
          %773 = sbr.rel (%p771) target = $region44
        $region43: #{tpu_custom_call.1} parent=31 // pred_region
          %s774 = smul.u32 2, %s31
          %s776 = ssub.s32 256, 256
          %777 = vsyncadd %s762, %s776
          %s778 = smul.addr %s30, 2
          %s779 = sadd.s32 %s774, %s778
          %s780 = smul.addr %s779, 128
          %s781 = scalar_lea.hbm %s3, %s780
          %s782 = sshll.u32 %s765, 4
          %s783 = int_to_ptr.vmem [resolvable:$true] %s782
          %788 = dma.vmem_to_hbm [thread:$0]  %s783, 256, %s781, %s762, 128, 128, 8
        $region44: #{tpu_custom_call.1} parent=31 // pred_fallthru
          _
        // Predicated region
        $region45: #{tpu_custom_call.1} parent=31 // pred_check
          %p789 = pneg %p156
        $region46: #{tpu_custom_call.1} parent=31 // pred_check_branch
          %791 = sbr.rel (%p789) target = $region48
        $region47: #{tpu_custom_call.1} parent=31 // pred_region
          %s792 = smul.u32 2, %s31
          %s794 = ssub.s32 256, 256
          %795 = vsyncadd %s767, %s794
          %s796 = smul.addr %s30, 2
          %s797 = sadd.s32 %s792, %s796
          %s798 = smul.addr %s797, 128
          %s799 = scalar_lea.hbm %s4, %s798
          %s800 = sshll.u32 %s770, 4
          %s801 = int_to_ptr.vmem [resolvable:$true] %s800
          %806 = dma.vmem_to_hbm [thread:$0]  %s801, 256, %s799, %s767, 128, 128, 8
        $region48: #{tpu_custom_call.1} parent=31 // pred_fallthru
          _
      $region32: #{tpu_custom_call.1} parent=5 // pred_fallthru
        _
      %p807 = scmp.le.s32.totalorder 2, %s21
      // Predicated region
      $region49: #{tpu_custom_call.1} parent=5 // pred_check
        %p808 = pneg %p807
      $region50: #{tpu_custom_call.1} parent=5 // pred_check_branch
        %810 = sbr.rel (%p808) target = $region52
      $region51: #{tpu_custom_call.1} parent=5 // pred_region
        %s811 = ssub.s32 %s21, 2
        // Predicated region
        $region53: #{tpu_custom_call.1} parent=51 // pred_check
          %p812 = pneg %p134
        $region54: #{tpu_custom_call.1} parent=51 // pred_check_branch
          %814 = sbr.rel (%p812) target = $region56
        $region55: #{tpu_custom_call.1} parent=51 // pred_region
          %s815 = sand.u32 %s119, 1
          %s816 = scalar_lea.sflag [#allocation4], %s815
          %s817 = sand.u32 %s119, 1
          %s818 = smul.addr %s817, 16
          %s819 = scalar_lea.vmem [#allocation7], %s818
          %820 = dma.done %s816, 256
        $region56: #{tpu_custom_call.1} parent=51 // pred_fallthru
          _
        // Predicated region
        $region57: #{tpu_custom_call.1} parent=51 // pred_check
          %p821 = pneg %p162
        $region58: #{tpu_custom_call.1} parent=51 // pred_check_branch
          %823 = sbr.rel (%p821) target = $region60
        $region59: #{tpu_custom_call.1} parent=51 // pred_region
          %s824 = sand.u32 %s147, 1
          %s825 = scalar_lea.sflag [#allocation9], %s824
          %s826 = sand.u32 %s147, 1
          %s827 = smul.addr %s826, 16
          %s828 = scalar_lea.vmem [#allocation8], %s827
          %829 = dma.done %s825, 256
        $region60: #{tpu_custom_call.1} parent=51 // pred_fallthru
          _
      $region52: #{tpu_custom_call.1} parent=5 // pred_fallthru
        _
    $region6: #{tpu_custom_call.1} parent=1 // loop_footer
      %s25 = sadd.s32 1, %s21
    $region7: #{tpu_custom_call.1} parent=1 // loop_footer_branch
      %20 = sbr.rel target = $region3
    $region8: #{tpu_custom_call.1} parent=1 // loop_exit
      _
    %830 = vsyncpa [#allocation3], 1
    %s831 = scalar_lea.sflag [#allocation3], 1
    %832 = vsyncpa %s831, 1
    %833 = vsyncpa [#allocation6], 1
    %834 = vsyncpa [#allocation4], 1
    %s835 = scalar_lea.sflag [#allocation4], 1
    %836 = vsyncpa %s835, 1
    %837 = vsyncpa [#allocation9], 1
    %s838 = scalar_lea.sflag [#allocation9], 1
    %839 = vsyncpa %s838, 1

</llo_original>
